<compile_context>
chip_gen: v5e
topology: v5e:2x2
jax: 0.10.0
libtpu: 0.0.40
codegen_flags: <defaults>
</compile_context>

<pallas_src>
import jax
import jax.numpy as jnp
from jax.experimental import pallas as pl
from jax.experimental.pallas import tpu as pltpu


def _cdiv(a, b):
    return -(-a // b)


def _round_up(x, m):
    return _cdiv(x, m) * m


# ----------------------------- Pallas kernels --------------------------------
def _gemm_bias_kernel_direct(w_ref, p_ref, b_ref, o_ref):
    # w_ref: (Np, K) VMEM-resident weight (constant index_map -> fetched once)
    # p_ref: (K, tm) patch tile, b_ref: (Np, 1) f32 bias, o_ref: (Np, tm)
    # Single K step: no accumulator scratch, no init/finalize.
    o_ref[...] = (
        jnp.dot(w_ref[...], p_ref[...], preferred_element_type=jnp.float32)
        + b_ref[...]
    ).astype(o_ref.dtype)


def _gemm_bias_kernel_acc(w_ref, p_ref, b_ref, o_ref, acc_ref):
    # Fallback for large K: K-tiled with f32 accumulator.
    k = pl.program_id(2)

    @pl.when(k == 0)
    def _():
        acc_ref[...] = jnp.zeros_like(acc_ref)

    acc_ref[...] += jnp.dot(w_ref[...], p_ref[...],
                            preferred_element_type=jnp.float32)

    @pl.when(k == pl.num_programs(2) - 1)
    def _():
        o_ref[...] = (acc_ref[...] + b_ref[...]).astype(o_ref.dtype)


# ------------------------------- GEMM wrapper ---------------------------------
def _patch_embed_gemm(patches, w_t, bias, *, out_dtype, n_out=None,
                      m_block=512, k_block=2048,
                      vmem_budget=18 * 1024 * 1024):
    """out[b, n, p] = sum_k w_t[n, k] * patches[b, k, p] + bias[n].

    patches: [B, K, P]   (P = Hp*Wp is the lane/minor axis)
    w_t    : [N, K]      GEMM weight (rows may already be padded to mult-of-128)
    bias   : [N] float32 (may already be padded)
    returns: [B, n_out, P] in out_dtype.
    """
    B, K, P = patches.shape
    N, K2 = w_t.shape
    assert K == K2, (K, K2)
    if n_out is None:
        n_out = N

    if patches.dtype != w_t.dtype:
        patches = patches.astype(w_t.dtype)

    # Lane/sublane friendly N (output sublane axis): pad to multiple of 128.
    Np = max(_round_up(N, 128), 128)
    if Np != N:
        w_t = jnp.pad(w_t, ((0, Np - N), (0, 0)))
    bias = jnp.asarray(bias, jnp.float32).reshape(-1)
    if bias.shape[0] != Np:
        bias = jnp.pad(bias, (0, Np - bias.shape[0]))
    bias2d = bias.reshape(Np, 1)

    p_item = patches.dtype.itemsize
    w_item = w_t.dtype.itemsize
    o_item = jnp.dtype(out_dtype).itemsize

    k_tiled = K > k_block
    tk = k_block if k_tiled else K

    # ---- choose the spatial (lane) tile tm under a VMEM budget --------------
    def _working_set(tm):
        return (2 * Np * tk * w_item        # weight (conservatively x2 buffers)
                + 2 * Np * 4                # bias
                + 2 * tk * tm * p_item      # patch tile, double-buffered
                + 2 * Np * tm * o_item      # output tile, double-buffered
                + Np * tm * 4)              # acc scratch (fallback path)

    if P <= 1024 and _working_set(P) <= vmem_budget:
        tm, Pp = P, P                       # full-extent block: no pad, no slice
    else:
        n128 = _cdiv(P, 128)
        n_tiles = max(_cdiv(n128 * 128, m_block), 1)
        tm = 128 * _cdiv(n128, n_tiles)     # multiple of 128, bounded padding
        while tm > 128 and _working_set(tm) > vmem_budget:
            tm -= 128
        Pp = tm * _cdiv(P, tm)

    if Pp != P:
        patches = jnp.pad(patches, ((0, 0), (0, 0), (0, Pp - P)))
    grid_m = Pp // tm

    cparams = pltpu.CompilerParams(
        dimension_semantics=("parallel", "parallel") if not k_tiled
        else ("parallel", "parallel", "arbitrary"),
        vmem_limit_bytes=40 * 1024 * 1024)

    if not k_tiled:
        cost = pl.CostEstimate(
            flops=2 * B * Np * K * Pp, transcendentals=0,
            bytes_accessed=(Np * K * w_item + B * K * Pp * p_item
                            + Np * 4 + B * Np * Pp * o_item))
        out = pl.pallas_call(
            _gemm_bias_kernel_direct,
            out_shape=jax.ShapeDtypeStruct((B, Np, Pp), out_dtype),
            grid_spec=pltpu.PrefetchScalarGridSpec(
                num_scalar_prefetch=0,
                grid=(B, grid_m),
                in_specs=[
                    pl.BlockSpec((Np, K), lambda b, m: (0, 0)),        # resident W
                    pl.BlockSpec((None, K, tm), lambda b, m: (b, 0, m)),
                    pl.BlockSpec((Np, 1), lambda b, m: (0, 0)),
                ],
                out_specs=pl.BlockSpec((None, Np, tm), lambda b, m: (b, 0, m)),
            ),
            compiler_params=cparams,
            cost_estimate=cost,
        )(w_t, patches, bias2d)
    else:
        # Rare fallback (very large K): zero-pad K so padded region contributes 0.
        Kp = _round_up(K, tk)
        if Kp != K:
            w_t = jnp.pad(w_t, ((0, 0), (0, Kp - K)))
            patches = jnp.pad(patches, ((0, 0), (0, Kp - K), (0, 0)))
        cost = pl.CostEstimate(
            flops=2 * B * Np * Kp * Pp, transcendentals=0,
            bytes_accessed=(B * grid_m * Np * Kp * w_item + B * Kp * Pp * p_item
                            + Np * 4 + B * Np * Pp * o_item))
        out = pl.pallas_call(
            _gemm_bias_kernel_acc,
            out_shape=jax.ShapeDtypeStruct((B, Np, Pp), out_dtype),
            grid_spec=pltpu.PrefetchScalarGridSpec(
                num_scalar_prefetch=0,
                grid=(B, grid_m, Kp // tk),
                in_specs=[
                    pl.BlockSpec((Np, tk), lambda b, m, k: (0, k)),
                    pl.BlockSpec((None, tk, tm), lambda b, m, k: (b, k, m)),
                    pl.BlockSpec((Np, 1), lambda b, m, k: (0, 0)),
                ],
                out_specs=pl.BlockSpec((None, Np, tm), lambda b, m, k: (b, 0, m)),
                scratch_shapes=[pltpu.VMEM((Np, tm), jnp.float32)],
            ),
            compiler_params=cparams,
            cost_estimate=cost,
        )(w_t, patches, bias2d)

    if Np != n_out:
        out = out[:, :n_out, :]
    if Pp != P:
        out = out[..., :P]
    return out


# --------------------------- Patch extraction (glue) --------------------------
def _extract_patches_kmajor(x, patch_size, stride, padding):
    """x: [B, C, H, W] -> ([B, C*kh*kw, Hp*Wp] with K in (C,kh,kw) order, Hp, Wp)."""
    B, C, H, W = x.shape
    kh, kw = patch_size
    sh, sw = stride
    ph, pw = padding
    Hp = (H + 2 * ph - kh) // sh + 1
    Wp = (W + 2 * pw - kw) // sw + 1

    if (sh, sw) == (kh, kw):
        # Non-overlapping fast path: pad/crop + reshape + single transpose.
        # TODO(synk): this transpose could be fused into the kernel's LHS
        # BlockSpec (tile directly over x) to drop one HBM round trip.
        xp = x
        if ph or pw:
            xp = jnp.pad(xp, ((0, 0), (0, 0), (ph, ph), (pw, pw)))
        xp = xp[:, :, :Hp * kh, :Wp * kw]
        p = xp.reshape(B, C, Hp, kh, Wp, kw)
        p = jnp.transpose(p, (0, 1, 3, 5, 2, 4))       # [B, C, kh, kw, Hp, Wp]
        patches = p.reshape(B, C * kh * kw, Hp * Wp)
    else:
        # Overlapping/strided path: channel-major (C, kh, kw) feature order,
        # already in the layout the kernel wants -> only a free reshape.
        # TODO(synk): an in-kernel manual-DMA im2col would avoid materializing
        # the kh*kw/(sh*sw)-times expanded array in HBM.
        p = jax.lax.conv_general_dilated_patches(
            x, filter_shape=(kh, kw), window_strides=(sh, sw),
            padding=[(ph, ph), (pw, pw)],
            dimension_numbers=("NCHW", "OIHW", "NCHW"))  # [B, C*kh*kw, Hp, Wp]
        patches = p.reshape(B, C * kh * kw, Hp * Wp)
    return patches, Hp, Wp


# ------------------------------ Module wrapper ---------------------------------
def _to_2tuple(v):
    return (v, v) if isinstance(v, int) else tuple(v)


class PointReducerPallas:
    """JAX/Pallas equivalent of PointRecuder (Conv2d projection + Identity norm)."""

    def __init__(self, patch_size=16, stride=16, padding=0, in_chans=3,
                 embed_dim=768, norm_layer=None, key=None,
                 compute_dtype=jnp.bfloat16):
        if norm_layer is not None:
            # TODO(synk): norm_layer=None -> Identity; non-None norm not implemented.
            raise NotImplementedError("Only norm_layer=None (Identity) is supported.")

        self.patch_size = _to_2tuple(patch_size)
        self.stride = _to_2tuple(stride)
        self.padding = _to_2tuple(padding)
        self.in_chans = in_chans
        self.embed_dim = embed_dim
        self.compute_dtype = compute_dtype

        if key is None:
            key = jax.random.PRNGKey(0)
        kw_key, kb_key = jax.random.split(key)
        kh, kw = self.patch_size
        fan_in = in_chans * kh * kw
        bound = 1.0 / (fan_in ** 0.5)
        # Conv2d weight layout: [embed_dim, in_chans, kh, kw] (kept for reference).
        self.weight = jax.random.uniform(
            kw_key, (embed_dim, in_chans, kh, kw), jnp.float32, -bound, bound)
        self.bias = jax.random.uniform(
            kb_key, (embed_dim,), jnp.float32, -bound, bound)

        # Precompute GEMM weight [Np, K] once: OIHW flatten -> (C,kh,kw) K-order,
        # zero-pad rows to a multiple of 128, cast to the MXU compute dtype.
        n_pad = max(_round_up(embed_dim, 128), 128)
        w_t = self.weight.reshape(embed_dim, fan_in)
        w_t = jnp.pad(w_t, ((0, n_pad - embed_dim), (0, 0)))
        self.w_t = jnp.asarray(w_t, dtype=compute_dtype)
        self.bias_p = jnp.pad(self.bias, (0, n_pad - embed_dim)).astype(jnp.float32)

    def __call__(self, x):
        # x: [B, C, H, W]  (NCHW, matching the PyTorch module)
        B, C, H, W = x.shape
        out_dtype = x.dtype
        # Cast before extraction: the materialized patches array is bf16 on the
        # default path, halving its HBM write+read traffic.
        x = x.astype(self.compute_dtype)
        patches, Hp, Wp = _extract_patches_kmajor(
            x, self.patch_size, self.stride, self.padding)
        out = _patch_embed_gemm(patches, self.w_t, self.bias_p,
                                out_dtype=out_dtype, n_out=self.embed_dim)
        # Output is already channel-major [B, embed_dim, Hp*Wp] -> free reshape.
        return out.reshape(B, self.embed_dim, Hp, Wp)


# ---------------------------------- Tests --------------------------------------
def _reference_conv(x, weight, bias, stride, padding):
    return jax.lax.conv_general_dilated(
        x, weight, window_strides=stride,
        padding=[(padding[0], padding[0]), (padding[1], padding[1])],
        dimension_numbers=("NCHW", "OIHW", "NCHW"),
    ) + bias.reshape(1, -1, 1, 1)


if __name__ == "__main__":
    key = jax.random.PRNGKey(0)
    k_x, k_p1, k_p2, k_w, k_b, k_q = jax.random.split(key, 6)

    B, C, H, W = 2, 4, 16, 16
    embed_dim = 32
    x = jax.random.normal(k_x, (B, C, H, W), jnp.float32)

    # 1) Exact f32 path, non-overlapping (reshape fast path).
    mod_f32 = PointReducerPallas(patch_size=4, stride=4, padding=0, in_chans=C,
                                 embed_dim=embed_dim, key=k_p1,
                                 compute_dtype=jnp.float32)
    out = jax.block_until_ready(mod_f32(x))
    ref = _reference_conv(x, mod_f32.weight, mod_f32.bias,
                          mod_f32.stride, mod_f32.padding)
    assert out.shape == (B, embed_dim, H // 4, W // 4), out.shape
    assert jnp.allclose(out, ref, atol=1e-4, rtol=1e-4), float(
        jnp.max(jnp.abs(out - ref)))

    # 2) bf16 MXU-input path (default), same config — looser tolerance.
    mod_bf16 = PointReducerPallas(patch_size=4, stride=4, padding=0, in_chans=C,
                                  embed_dim=embed_dim, key=k_p1)
    out_bf = jax.block_until_ready(mod_bf16(x))
    assert jnp.allclose(out_bf, ref, atol=3e-2, rtol=3e-2), float(
        jnp.max(jnp.abs(out_bf - ref)))

    # 3) Overlapping / padded path (conv_general_dilated_patches), f32.
    mod_ovl = PointReducerPallas(patch_size=4, stride=2, padding=1, in_chans=C,
                                 embed_dim=embed_dim, key=k_p2,
                                 compute_dtype=jnp.float32)
    out_o = jax.block_until_ready(mod_ovl(x))
    ref_o = _reference_conv(x, mod_ovl.weight, mod_ovl.bias,
                            mod_ovl.stride, mod_ovl.padding)
    assert out_o.shape == ref_o.shape, (out_o.shape, ref_o.shape)
    assert jnp.allclose(out_o, ref_o, atol=1e-4, rtol=1e-4), float(
        jnp.max(jnp.abs(out_o - ref_o)))

    # 4) Exercise the K-tiled fallback kernel (forced small k_block).
    Kbig, Pbig, Nbig = 512, 256, 64
    w_big = jax.random.normal(k_w, (Nbig, Kbig), jnp.float32) * 0.05
    b_big = jax.random.normal(k_b, (Nbig,), jnp.float32)
    p_big = jax.random.normal(k_q, (2, Kbig, Pbig), jnp.float32)
    got = jax.block_until_ready(
        _patch_embed_gemm(p_big, w_big, b_big, out_dtype=jnp.float32,
                          k_block=256))
    want = jnp.einsum("nk,bkp->bnp", w_big, p_big) + b_big[None, :, None]
    assert got.shape == want.shape, (got.shape, want.shape)
    assert jnp.allclose(got, want, atol=2e-3, rtol=2e-3), float(
        jnp.max(jnp.abs(got - want)))

    print("KERNEL_OK")
</pallas_src>

<mosaic_0001>
module attributes {stable_mosaic.version = 11 : i64} {
  func.func @_gemm_bias_kernel_direct(%arg0: i32, %arg1: i32, %arg2: memref<128x64xf32, #tpu.memory_space<vmem>>, %arg3: memref<1x64x16xf32, #tpu.memory_space<vmem>>, %arg4: memref<128x1xf32, #tpu.memory_space<vmem>>, %arg5: memref<1x128x16xf32, #tpu.memory_space<vmem>>) attributes {dimension_semantics = [#tpu.dimension_semantics<parallel>, #tpu.dimension_semantics<parallel>], iteration_bounds = array<i64: 2, 1>, scalar_prefetch = 0 : i64, scratch_operands = 0 : i64, tpu.core_type = #tpu.core_type<tc>, window_params = [{pipeline_mode = #tpu.pipeline_mode<synchronous>, transform_indices = @transform_0, window_bounds = array<i64: 128, 64>}, {transform_indices = @transform_1, window_bounds = array<i64: 1, 64, 16>}, {pipeline_mode = #tpu.pipeline_mode<synchronous>, transform_indices = @transform_2, window_bounds = array<i64: 128, 1>}, {transform_indices = @transform_3, window_bounds = array<i64: 1, 128, 16>}]} {
    %c0 = arith.constant 0 : index
    %c0_0 = arith.constant 0 : index
    %0 = vector.load %arg2[%c0, %c0_0] : memref<128x64xf32, #tpu.memory_space<vmem>>, vector<128x64xf32>
    %c0_1 = arith.constant 0 : index
    %c0_2 = arith.constant 0 : index
    %c0_3 = arith.constant 0 : index
    %1 = vector.load %arg3[%c0_1, %c0_2, %c0_3] : memref<1x64x16xf32, #tpu.memory_space<vmem>>, vector<1x64x16xf32>
    %2 = vector.shape_cast %1 : vector<1x64x16xf32> to vector<64x16xf32>
    %cst = arith.constant dense<0.000000e+00> : vector<128x16xf32>
    %3 = tpu.matmul %0, %2, %cst {dimension_numbers = #tpu.dot_dimension_numbers<[1], [0], [0], [1], [0, 0, 1, 1], [], []>} : vector<128x64xf32>, vector<64x16xf32>, vector<128x16xf32> -> vector<128x16xf32>
    %c0_4 = arith.constant 0 : index
    %c0_5 = arith.constant 0 : index
    %4 = vector.load %arg4[%c0_4, %c0_5] : memref<128x1xf32, #tpu.memory_space<vmem>>, vector<128x1xf32>
    %5 = vector.broadcast %4 : vector<128x1xf32> to vector<128x16xf32>
    %6 = arith.addf %3, %5 : vector<128x16xf32>
    %c0_6 = arith.constant 0 : index
    %c0_7 = arith.constant 0 : index
    %c0_8 = arith.constant 0 : index
    %7 = vector.load %arg5[%c0_6, %c0_7, %c0_8] : memref<1x128x16xf32, #tpu.memory_space<vmem>>, vector<1x128x16xf32>
    %8 = vector.shape_cast %7 : vector<1x128x16xf32> to vector<128x16xf32>
    %9 = vector.shape_cast %6 : vector<128x16xf32> to vector<1x128x16xf32>
    tpu.vector_store %arg5[%c0_6, %c0_7, %c0_8], %9 {strides = array<i32>} : memref<1x128x16xf32, #tpu.memory_space<vmem>>, vector<1x128x16xf32>,
    return
  }
  func.func @transform_0(%arg0: i32, %arg1: i32) -> (i32, i32) {
    %c0_i32 = arith.constant 0 : i32
    %c0_i32_0 = arith.constant 0 : i32
    %c0_i32_1 = arith.constant 0 : i32
    return %c0_i32, %c0_i32_0 : i32, i32
  }
  func.func @transform_1(%arg0: i32, %arg1: i32) -> (i32, i32, i32) {
    %c0_i32 = arith.constant 0 : i32
    %c0_i32_0 = arith.constant 0 : i32
    return %arg0, %c0_i32, %arg1 : i32, i32, i32
  }
  func.func @transform_2(%arg0: i32, %arg1: i32) -> (i32, i32) {
    %c0_i32 = arith.constant 0 : i32
    %c0_i32_0 = arith.constant 0 : i32
    %c0_i32_1 = arith.constant 0 : i32
    return %c0_i32, %c0_i32_0 : i32, i32
  }
  func.func @transform_3(%arg0: i32, %arg1: i32) -> (i32, i32, i32) {
    %c0_i32 = arith.constant 0 : i32
    %c0_i32_0 = arith.constant 0 : i32
    return %arg0, %c0_i32, %arg1 : i32, i32, i32
  }
}

</mosaic_0001>

<llo_original>
// kernel: tpu_custom_call.1
$region0: #{tpu_custom_call.1}
  #allocation0 [shape = 'u32[]', space=smem, size = 0x4, offset = 0x4, fixed_abs, tag = 'smem constant byte address 0x4 - core index']
  #allocation1 [shape = 'u32[72,128]{1,0:T(1,128)}', space=vmem, size = 0x9000, scoped, tag = 'internal scratch']
  %s0 = inlined_call_operand.vmem [shape: f32[128,64], index: 0, kind: input, shape index: {}]
  %s1 = inlined_call_operand.vmem [shape: f32[2,64,16], index: 1, kind: input, shape index: {}]
  %s2 = inlined_call_operand.vmem [shape: f32[128,1], index: 2, kind: input, shape index: {}]
  %s3 = inlined_call_operand.vmem [shape: f32[2,128,16], index: 3, kind: output, shape index: {}]
  %s4 = sld [smem:[#allocation0]]
  $region45: #{tpu_custom_call.1} parent=0
    _
  %s6 = ssub.s32 1, %s4
  %s7 = scalar_select 0, %s6, %s4
  loop: start=0, step=1, limit=4
  $region2: #{tpu_custom_call.1} parent=0 // loop_pre_header
    _
  $region3: #{tpu_custom_call.1} parent=0 // loop_header
    %s9 = sphi 0, %s13
    %p10 = scmp.ge.s32.totalorder %s9, 4
    %s16 = sphi 0, %s28
    %s17 = sphi 0, %s24
    %s18 = sphi 0, %s16
    %s19 = sphi 0, %s17
    %s20 = sphi 0, %s18
    %s21 = sphi 0, %s19
    %s29 = sphi 0, %s29
    %s31 = sphi 0, %s29
    %s32 = sphi 0, %s31
    %s46 = sphi 0, %s32
    %s54 = sphi 0, %s56
    %s57 = sphi 0, %s54
    %s58 = sphi 0, %s57
    %s74 = sphi 0, %s58
    %s78 = sphi 0, %s78
    %s80 = sphi 0, %s78
    %s81 = sphi 0, %s80
    %s95 = sphi 0, %s81
    %s103 = sphi 0, %s105
    %s106 = sphi 0, %s103
    %s107 = sphi 0, %s106
    %s123 = sphi 0, %s107
  $region4: #{tpu_custom_call.1} parent=0 // loop_header_branch
    %12 = sbr.rel (%p10) target = $region8
  $region5: #{tpu_custom_call.1} parent=0 // loop_body
    %s14 = ssub.s32 %s9, 1
    %s15 = ssub.s32 %s9, 2
    %s22 = sadd.s32 1, %s17
    %p23 = scmp.ge.s32.totalorder %s22, 1
    %s24 = scalar_select %p23, 0, %s22
    %s25 = sadd.s32 1, %s16
    %s26 = scalar_select %p23, %s25, %s16
    %p27 = scmp.ge.s32.totalorder %s26, 2
    %s28 = scalar_select %p27, 0, %s26
    %s30 = sadd.s32 %s29, 1
    %p33 = scmp.eq.s32.totalorder %s9, 1
    %p34 = scmp.ne.s32.totalorder %s29, %s31
    %p35 = scmp.eq.s32.totalorder %s9, 0
    %p36 = por %p34, %p35
    %p37 = scmp.ne.s32.totalorder %s29, %s31
    %p38 = scmp.eq.s32.totalorder %s14, 1
    %p39 = por %p37, %p38
    %p40 = scmp.ne.s32.totalorder %s31, %s32
    %p41 = scmp.eq.s32.totalorder %s14, 0
    %p42 = por %p40, %p41
    %p43 = scmp.ne.s32.totalorder %s31, %s32
    %p44 = scmp.eq.s32.totalorder %s15, 1
    %p45 = por %p43, %p44
    %p47 = scmp.ne.s32.totalorder %s32, %s46
    %p48 = scmp.eq.s32.totalorder %s15, 0
    %p49 = por %p47, %p48
    %s50 = ssub.s32 %s16, %s28
    %s51 = ssub.s32 %s17, %s24
    %s52 = sor.u32 %s50, %s51
    %p53 = scmp.eq.s32.totalorder %s52, 0
    %s55 = sadd.s32 %s54, 1
    %s56 = scalar_select %p53, %s54, %s55
    %p59 = pneg %p53
    %p60 = scmp.eq.s32.totalorder %s9, 1
    %p61 = por %p59, %p60
    %p62 = scmp.ne.s32.totalorder %s54, %s57
    %p63 = scmp.eq.s32.totalorder %s9, 0
    %p64 = por %p62, %p63
    %p65 = scmp.ne.s32.totalorder %s54, %s57
    %p66 = scmp.eq.s32.totalorder %s14, 1
    %p67 = por %p65, %p66
    %p68 = scmp.ne.s32.totalorder %s57, %s58
    %p69 = scmp.eq.s32.totalorder %s14, 0
    %p70 = por %p68, %p69
    %p71 = scmp.ne.s32.totalorder %s57, %s58
    %p72 = scmp.eq.s32.totalorder %s15, 1
    %p73 = por %p71, %p72
    %p75 = scmp.ne.s32.totalorder %s58, %s74
    %p76 = scmp.eq.s32.totalorder %s15, 0
    %p77 = por %p75, %p76
    %s79 = sadd.s32 %s78, 1
    %p82 = scmp.eq.s32.totalorder %s9, 1
    %p83 = scmp.ne.s32.totalorder %s78, %s80
    %p84 = scmp.eq.s32.totalorder %s9, 0
    %p85 = por %p83, %p84
    %p86 = scmp.ne.s32.totalorder %s78, %s80
    %p87 = scmp.eq.s32.totalorder %s14, 1
    %p88 = por %p86, %p87
    %p89 = scmp.ne.s32.totalorder %s80, %s81
    %p90 = scmp.eq.s32.totalorder %s14, 0
    %p91 = por %p89, %p90
    %p92 = scmp.ne.s32.totalorder %s80, %s81
    %p93 = scmp.eq.s32.totalorder %s15, 1
    %p94 = por %p92, %p93
    %p96 = scmp.ne.s32.totalorder %s81, %s95
    %p97 = scmp.eq.s32.totalorder %s15, 0
    %p98 = por %p96, %p97
    %s99 = ssub.s32 %s16, %s28
    %s100 = ssub.s32 %s17, %s24
    %s101 = sor.u32 %s99, %s100
    %p102 = scmp.eq.s32.totalorder %s101, 0
    %s104 = sadd.s32 %s103, 1
    %s105 = scalar_select %p102, %s103, %s104
    %p108 = pneg %p102
    %p109 = scmp.eq.s32.totalorder %s9, 1
    %p110 = por %p108, %p109
    %p111 = scmp.ne.s32.totalorder %s103, %s106
    %p112 = scmp.eq.s32.totalorder %s9, 0
    %p113 = por %p111, %p112
    %p114 = scmp.ne.s32.totalorder %s103, %s106
    %p115 = scmp.eq.s32.totalorder %s14, 1
    %p116 = por %p114, %p115
    %p117 = scmp.ne.s32.totalorder %s106, %s107
    %p118 = scmp.eq.s32.totalorder %s14, 0
    %p119 = por %p117, %p118
    %p120 = scmp.ne.s32.totalorder %s106, %s107
    %p121 = scmp.eq.s32.totalorder %s15, 1
    %p122 = por %p120, %p121
    %p124 = scmp.ne.s32.totalorder %s107, %s123
    %p125 = scmp.eq.s32.totalorder %s15, 0
    %p126 = por %p124, %p125
    %p127 = scmp.le.s32.totalorder 1, %s9
    %p128 = scmp.lt.s32.totalorder %s9, 3
    %p129 = pnand %p127, %p128
    %p130 = pneg %p129
    // Predicated region
    $region9: #{tpu_custom_call.1} parent=5 // pred_check
      _
    $region10: #{tpu_custom_call.1} parent=5 // pred_check_branch
      %132 = sbr.rel (%p129) target = $region12
    $region11: #{tpu_custom_call.1} parent=5 // pred_region
      %s133 = ssub.s32 %s9, 1
      // Predicated region
      $region13: #{tpu_custom_call.1} parent=11 // pred_check
        %p134 = pneg %p42
      $region14: #{tpu_custom_call.1} parent=11 // pred_check_branch
        %136 = sbr.rel (%p134) target = $region16
      $region15: #{tpu_custom_call.1} parent=11 // pred_region
        _
      $region16: #{tpu_custom_call.1} parent=11 // pred_fallthru
        _
      // Predicated region
      $region17: #{tpu_custom_call.1} parent=11 // pred_check
        %p137 = pneg %p91
      $region18: #{tpu_custom_call.1} parent=11 // pred_check_branch
        %139 = sbr.rel (%p137) target = $region20
      $region19: #{tpu_custom_call.1} parent=11 // pred_region
        _
      $region20: #{tpu_custom_call.1} parent=11 // pred_fallthru
        _
    $region12: #{tpu_custom_call.1} parent=5 // pred_fallthru
      _
    %p140 = scmp.lt.s32.totalorder %s9, 2
    // Predicated region
    $region21: #{tpu_custom_call.1} parent=5 // pred_check
      %p141 = pneg %p140
    $region22: #{tpu_custom_call.1} parent=5 // pred_check_branch
      %143 = sbr.rel (%p141) target = $region24
    $region23: #{tpu_custom_call.1} parent=5 // pred_region
      // Predicated region
      $region25: #{tpu_custom_call.1} parent=23 // pred_check
        %p144 = pneg %p64
      $region26: #{tpu_custom_call.1} parent=23 // pred_check_branch
        %146 = sbr.rel (%p144) target = $region28
      $region27: #{tpu_custom_call.1} parent=23 // pred_region
        %p147 = scmp.lt.s32.totalorder %s16, 1
        %s148 = scalar_select %p147, %s16, 1
        %p149 = scmp.lt.s32.totalorder %s17, 0
        %s150 = scalar_select %p149, %s17, 0
        %s151 = smul.addr %s148, 8
        %s152 = sadd.s32 %s150, %s151
        %s153 = smul.addr %s152, 8
        %s154 = scalar_lea.vmem %s1, %s153
      $region28: #{tpu_custom_call.1} parent=23 // pred_fallthru
        _
    $region24: #{tpu_custom_call.1} parent=5 // pred_fallthru
      _
    %p155 = scmp.le.s32.totalorder 1, %s9
    %p156 = scmp.lt.s32.totalorder %s9, 3
    %p157 = pnand %p155, %p156
    %p158 = pneg %p157
    // Predicated region
    $region29: #{tpu_custom_call.1} parent=5 // pred_check
      _
    $region30: #{tpu_custom_call.1} parent=5 // pred_check_branch
      %160 = sbr.rel (%p157) target = $region32
    $region31: #{tpu_custom_call.1} parent=5 // pred_region
      %s161 = ssub.s32 %s9, 1
      %p162 = pneg %p42
      %p163 = pneg %p39
      %p164 = scmp.lt.s32.totalorder %s18, 1
      %s165 = scalar_select %p164, %s18, 1
      %p166 = scmp.lt.s32.totalorder %s19, 0
      %s167 = scalar_select %p166, %s19, 0
      %s168 = smul.addr %s165, 8
      %s169 = sadd.s32 %s167, %s168
      %s170 = smul.addr %s169, 8
      %s171 = scalar_lea.vmem %s1, %s170
      %p172 = pneg %p70
      %p173 = pneg %p67
      %p174 = pneg %p91
      %p175 = pneg %p88
      %p176 = pneg %p119
      %p177 = pneg %p116
      %p178 = scmp.lt.s32.totalorder %s18, 1
      %s179 = scalar_select %p178, %s18, 1
      %p180 = scmp.lt.s32.totalorder %s19, 0
      %s181 = scalar_select %p180, %s19, 0
      %s182 = smul.addr %s179, 16
      %s183 = sadd.s32 %s181, %s182
      %s184 = smul.addr %s183, 8
      %s185 = scalar_lea.vmem %s3, %s184
      %p186 = scmp.lt.s32.totalorder %s18, 1
      %s187 = scalar_select %p186, %s18, 1
      %p188 = scmp.lt.s32.totalorder %s19, 0
      %s189 = scalar_select %p188, %s19, 0
      %s190 = smul.addr %s187, 8
      %s191 = sadd.s32 %s189, %s190
      %s192 = smul.addr %s191, 8
      %s193 = scalar_lea.vmem %s1, %s192
      %p194 = scmp.lt.s32.totalorder %s18, 1
      %s195 = scalar_select %p194, %s18, 1
      %p196 = scmp.lt.s32.totalorder %s19, 0
      %s197 = scalar_select %p196, %s19, 0
      %s198 = smul.addr %s195, 16
      %s199 = sadd.s32 %s197, %s198
      %s200 = smul.addr %s199, 8
      %s201 = scalar_lea.vmem %s3, %s200
      %v202 = vld [vmem:[%s0] sm:$0xff]
      %v203 = vld [vmem:[%s0 + $0x8] sm:$0xff]
      %v204 = vld [vmem:[%s0 + $0x10] sm:$0xff]
      %v205 = vld [vmem:[%s0 + $0x18] sm:$0xff]
      %v206 = vld [vmem:[%s0 + $0x20] sm:$0xff]
      %v207 = vld [vmem:[%s0 + $0x28] sm:$0xff]
      %v208 = vld [vmem:[%s0 + $0x30] sm:$0xff]
      %v209 = vld [vmem:[%s0 + $0x38] sm:$0xff]
      %v210 = vld [vmem:[%s0 + $0x40] sm:$0xff]
      %v211 = vld [vmem:[%s0 + $0x48] sm:$0xff]
      %v212 = vld [vmem:[%s0 + $0x50] sm:$0xff]
      %v213 = vld [vmem:[%s0 + $0x58] sm:$0xff]
      %v214 = vld [vmem:[%s0 + $0x60] sm:$0xff]
      %v215 = vld [vmem:[%s0 + $0x68] sm:$0xff]
      %v216 = vld [vmem:[%s0 + $0x70] sm:$0xff]
      %v217 = vld [vmem:[%s0 + $0x78] sm:$0xff]
      %v218 = vld [vmem:[%s193] sm:$0xff]
      %v219 = vld [vmem:[%s193 + $0x8] sm:$0xff]
      %v220 = vld [vmem:[%s193 + $0x10] sm:$0xff]
      %v221 = vld [vmem:[%s193 + $0x18] sm:$0xff]
      %v222 = vld [vmem:[%s193 + $0x20] sm:$0xff]
      %v223 = vld [vmem:[%s193 + $0x28] sm:$0xff]
      %v224 = vld [vmem:[%s193 + $0x30] sm:$0xff]
      %v225 = vld [vmem:[%s193 + $0x38] sm:$0xff]
      %v226 = vld [vmem:[%s2] sm:$0xff]
      %v227 = vld [vmem:[%s2 + $0x8] sm:$0xff]
      %v228 = vld [vmem:[%s2 + $0x10] sm:$0xff]
      %v229 = vld [vmem:[%s2 + $0x18] sm:$0xff]
      %v230 = vld [vmem:[%s2 + $0x20] sm:$0xff]
      %v231 = vld [vmem:[%s2 + $0x28] sm:$0xff]
      %v232 = vld [vmem:[%s2 + $0x30] sm:$0xff]
      %v233 = vld [vmem:[%s2 + $0x38] sm:$0xff]
      %v234 = vld [vmem:[%s2 + $0x40] sm:$0xff]
      %v235 = vld [vmem:[%s2 + $0x48] sm:$0xff]
      %v236 = vld [vmem:[%s2 + $0x50] sm:$0xff]
      %v237 = vld [vmem:[%s2 + $0x58] sm:$0xff]
      %v238 = vld [vmem:[%s2 + $0x60] sm:$0xff]
      %v239 = vld [vmem:[%s2 + $0x68] sm:$0xff]
      %v240 = vld [vmem:[%s2 + $0x70] sm:$0xff]
      %v241 = vld [vmem:[%s2 + $0x78] sm:$0xff]
      %243 = vset.pattern.permute.xlu0 0
      %244 = vperm.xlu0 %243, %v226
      %v245 = vpop.permute.xlu0 %244
      %248 = vset.pattern.permute.xlu0 0
      %249 = vperm.xlu0 %248, %v227
      %v250 = vpop.permute.xlu0 %249
      %253 = vset.pattern.permute.xlu0 0
      %254 = vperm.xlu0 %253, %v228
      %v255 = vpop.permute.xlu0 %254
      %258 = vset.pattern.permute.xlu0 0
      %259 = vperm.xlu0 %258, %v229
      %v260 = vpop.permute.xlu0 %259
      %263 = vset.pattern.permute.xlu0 0
      %264 = vperm.xlu0 %263, %v230
      %v265 = vpop.permute.xlu0 %264
      %268 = vset.pattern.permute.xlu0 0
      %269 = vperm.xlu0 %268, %v231
      %v270 = vpop.permute.xlu0 %269
      %273 = vset.pattern.permute.xlu0 0
      %274 = vperm.xlu0 %273, %v232
      %v275 = vpop.permute.xlu0 %274
      %278 = vset.pattern.permute.xlu0 0
      %279 = vperm.xlu0 %278, %v233
      %v280 = vpop.permute.xlu0 %279
      %283 = vset.pattern.permute.xlu0 0
      %284 = vperm.xlu0 %283, %v234
      %v285 = vpop.permute.xlu0 %284
      %288 = vset.pattern.permute.xlu0 0
      %289 = vperm.xlu0 %288, %v235
      %v290 = vpop.permute.xlu0 %289
      %293 = vset.pattern.permute.xlu0 0
      %294 = vperm.xlu0 %293, %v236
      %v295 = vpop.permute.xlu0 %294
      %298 = vset.pattern.permute.xlu0 0
      %299 = vperm.xlu0 %298, %v237
      %v300 = vpop.permute.xlu0 %299
      %303 = vset.pattern.permute.xlu0 0
      %304 = vperm.xlu0 %303, %v238
      %v305 = vpop.permute.xlu0 %304
      %308 = vset.pattern.permute.xlu0 0
      %309 = vperm.xlu0 %308, %v239
      %v310 = vpop.permute.xlu0 %309
      %313 = vset.pattern.permute.xlu0 0
      %314 = vperm.xlu0 %313, %v240
      %v315 = vpop.permute.xlu0 %314
      %318 = vset.pattern.permute.xlu0 0
      %319 = vperm.xlu0 %318, %v241
      %v320 = vpop.permute.xlu0 %319
      %vm322 = vcmask 523264
      %v324 = vsel %vm322, %v202, 0
      %v327 = vsel %vm322, %v203, 0
      %v330 = vsel %vm322, %v204, 0
      %v333 = vsel %vm322, %v205, 0
      %v336 = vsel %vm322, %v206, 0
      %v339 = vsel %vm322, %v207, 0
      %v342 = vsel %vm322, %v208, 0
      %v345 = vsel %vm322, %v209, 0
      %v348 = vsel %vm322, %v210, 0
      %v351 = vsel %vm322, %v211, 0
      %v354 = vsel %vm322, %v212, 0
      %v357 = vsel %vm322, %v213, 0
      %v360 = vsel %vm322, %v214, 0
      %v363 = vsel %vm322, %v215, 0
      %v366 = vsel %vm322, %v216, 0
      %v369 = vsel %vm322, %v217, 0
      %371 = vmatpush.msra.mxu0 0.0
      %372 = vmatpush.msra.mxu0 0.0
      %373 = vmatpush.msra.mxu0 0.0
      %374 = vmatpush.msra.mxu0 0.0
      %375 = vmatpush.msra.mxu0 0.0
      %376 = vmatpush.msra.mxu0 0.0
      %377 = vmatpush.msra.mxu0 0.0
      %378 = vmatpush.msra.mxu0 0.0
      %379 = vmatpush.msra.mxu0 %v225
      %380 = vmatpush.msra.mxu0 %v224
      %381 = vmatpush.msra.mxu0 %v223
      %382 = vmatpush.msra.mxu0 %v222
      %383 = vmatpush.msra.mxu0 %v221
      %384 = vmatpush.msra.mxu0 %v220
      %385 = vmatpush.msra.mxu0 %v219
      %386 = vmatpush.msra.mxu0 %v218
      %387 = vmatmul.f32.gmra.mxu0 %v324
      %v388 = vpop.f32.mrf.mxu0
      %v389 = vadd.f32 %v245, %v388
      %390 = vmatmul.f32.gmra.mxu0 %v327
      %v391 = vpop.f32.mrf.mxu0
      %v392 = vadd.f32 %v250, %v391
      %393 = vmatmul.f32.gmra.mxu0 %v330
      %v394 = vpop.f32.mrf.mxu0
      %v395 = vadd.f32 %v255, %v394
      %396 = vmatmul.f32.gmra.mxu0 %v333
      %v397 = vpop.f32.mrf.mxu0
      %v398 = vadd.f32 %v260, %v397
      %399 = vmatmul.f32.gmra.mxu0 %v336
      %v400 = vpop.f32.mrf.mxu0
      %v401 = vadd.f32 %v265, %v400
      %402 = vmatmul.f32.gmra.mxu0 %v339
      %v403 = vpop.f32.mrf.mxu0
      %v404 = vadd.f32 %v270, %v403
      %405 = vmatmul.f32.gmra.mxu0 %v342
      %v406 = vpop.f32.mrf.mxu0
      %v407 = vadd.f32 %v275, %v406
      %408 = vmatmul.f32.gmra.mxu0 %v345
      %v409 = vpop.f32.mrf.mxu0
      %v410 = vadd.f32 %v280, %v409
      %411 = vmatmul.f32.gmra.mxu0 %v348
      %v412 = vpop.f32.mrf.mxu0
      %v413 = vadd.f32 %v285, %v412
      %414 = vmatmul.f32.gmra.mxu0 %v351
      %v415 = vpop.f32.mrf.mxu0
      %v416 = vadd.f32 %v290, %v415
      %417 = vmatmul.f32.gmra.mxu0 %v354
      %v418 = vpop.f32.mrf.mxu0
      %v419 = vadd.f32 %v295, %v418
      %420 = vmatmul.f32.gmra.mxu0 %v357
      %v421 = vpop.f32.mrf.mxu0
      %v422 = vadd.f32 %v300, %v421
      %423 = vmatmul.f32.gmra.mxu0 %v360
      %v424 = vpop.f32.mrf.mxu0
      %v425 = vadd.f32 %v305, %v424
      %426 = vmatmul.f32.gmra.mxu0 %v363
      %v427 = vpop.f32.mrf.mxu0
      %v428 = vadd.f32 %v310, %v427
      %429 = vmatmul.f32.gmra.mxu0 %v366
      %v430 = vpop.f32.mrf.mxu0
      %v431 = vadd.f32 %v315, %v430
      %432 = vmatmul.f32.gmra.mxu0 %v369
      %v433 = vpop.f32.mrf.mxu0
      %v434 = vadd.f32 %v320, %v433
      %435 = vdwg.mxu0
      %vm436 = vcmask 130048
      %437 = vst.msk [vmem:[%s201] sm:$0xff] %vm436, %v389
      %438 = vst.msk [vmem:[%s201 + $0x8] sm:$0xff] %vm436, %v392
      %439 = vst.msk [vmem:[%s201 + $0x10] sm:$0xff] %vm436, %v395
      %440 = vst.msk [vmem:[%s201 + $0x18] sm:$0xff] %vm436, %v398
      %441 = vst.msk [vmem:[%s201 + $0x20] sm:$0xff] %vm436, %v401
      %442 = vst.msk [vmem:[%s201 + $0x28] sm:$0xff] %vm436, %v404
      %443 = vst.msk [vmem:[%s201 + $0x30] sm:$0xff] %vm436, %v407
      %444 = vst.msk [vmem:[%s201 + $0x38] sm:$0xff] %vm436, %v410
      %445 = vst.msk [vmem:[%s201 + $0x40] sm:$0xff] %vm436, %v413
      %446 = vst.msk [vmem:[%s201 + $0x48] sm:$0xff] %vm436, %v416
      %447 = vst.msk [vmem:[%s201 + $0x50] sm:$0xff] %vm436, %v419
      %448 = vst.msk [vmem:[%s201 + $0x58] sm:$0xff] %vm436, %v422
      %449 = vst.msk [vmem:[%s201 + $0x60] sm:$0xff] %vm436, %v425
      %450 = vst.msk [vmem:[%s201 + $0x68] sm:$0xff] %vm436, %v428
      %451 = vst.msk [vmem:[%s201 + $0x70] sm:$0xff] %vm436, %v431
      %452 = vst.msk [vmem:[%s201 + $0x78] sm:$0xff] %vm436, %v434
      %p453 = scmp.lt.s32.totalorder %s18, 1
      %s454 = scalar_select %p453, %s18, 1
      %p455 = scmp.lt.s32.totalorder %s19, 0
      %s456 = scalar_select %p455, %s19, 0
      %s457 = smul.addr %s454, 16
      %s458 = sadd.s32 %s456, %s457
      %s459 = smul.addr %s458, 8
      %s460 = scalar_lea.vmem %s3, %s459
      // Predicated region
      $region33: #{tpu_custom_call.1} parent=31 // pred_check
        %p461 = pneg %p116
      $region34: #{tpu_custom_call.1} parent=31 // pred_check_branch
        %463 = sbr.rel (%p461) target = $region36
      $region35: #{tpu_custom_call.1} parent=31 // pred_region
        _
      $region36: #{tpu_custom_call.1} parent=31 // pred_fallthru
        _
    $region32: #{tpu_custom_call.1} parent=5 // pred_fallthru
      _
    %p464 = scmp.le.s32.totalorder 2, %s9
    // Predicated region
    $region37: #{tpu_custom_call.1} parent=5 // pred_check
      %p465 = pneg %p464
    $region38: #{tpu_custom_call.1} parent=5 // pred_check_branch
      %467 = sbr.rel (%p465) target = $region40
    $region39: #{tpu_custom_call.1} parent=5 // pred_region
      %s468 = ssub.s32 %s9, 2
      // Predicated region
      $region41: #{tpu_custom_call.1} parent=39 // pred_check
        %p469 = pneg %p122
      $region42: #{tpu_custom_call.1} parent=39 // pred_check_branch
        %471 = sbr.rel (%p469) target = $region44
      $region43: #{tpu_custom_call.1} parent=39 // pred_region
        %p472 = scmp.lt.s32.totalorder %s20, 1
        %s473 = scalar_select %p472, %s20, 1
        %p474 = scmp.lt.s32.totalorder %s21, 0
        %s475 = scalar_select %p474, %s21, 0
        %s476 = smul.addr %s473, 16
        %s477 = sadd.s32 %s475, %s476
        %s478 = smul.addr %s477, 8
        %s479 = scalar_lea.vmem %s3, %s478
      $region44: #{tpu_custom_call.1} parent=39 // pred_fallthru
        _
    $region40: #{tpu_custom_call.1} parent=5 // pred_fallthru
      _
  $region6: #{tpu_custom_call.1} parent=0 // loop_footer
    %s13 = sadd.s32 1, %s9
  $region7: #{tpu_custom_call.1} parent=0 // loop_footer_branch
    %8 = sbr.rel target = $region3
  $region8: #{tpu_custom_call.1} parent=0 // loop_exit
    _

</llo_original>
